<compile_context>
chip_gen: v7x
topology: tpu7x:2x2x1
jax: 0.10.0
libtpu: 0.0.40
codegen_flags: <defaults>
</compile_context>

<pallas_src>
import functools

import jax
import jax.numpy as jnp
from jax.experimental import pallas as pl
from jax.experimental.pallas import tpu as pltpu

_PREC = jax.lax.Precision.HIGHEST          # full-precision f32 MXU passes
_VMEM_LIMIT = 32 * 1024 * 1024             # explicit; safe on v5e/v6e/v7x


def _pick_tk(hw, c, itemsize, cap_bytes=4 << 20):
    """Largest multiple-of-128 divisor of hw whose (C, tk) tile is <= ~4 MiB;
    falls back to the full plane for small / non-128-aligned HW."""
    if hw * c * itemsize <= cap_bytes or hw % 128 != 0:
        return hw
    best = hw
    m = 128
    while m < hw:
        if hw % m == 0 and m * c * itemsize <= cap_bytes:
            best = m
        m += 128
    return best


def _gram_kernel(x_ref, g_ref, *, inv_norm):
    """Target Gram: accumulate X @ X.T over HW tiles into the output block."""
    k = pl.program_id(0)

    @pl.when(k == 0)
    def _():
        g_ref[...] = jnp.zeros_like(g_ref)

    x = x_ref[...].astype(jnp.float32)                     # (C, tk)
    g_ref[...] += jax.lax.dot_general(
        x, x, (((1,), (1,)), ((), ())),                    # X @ X.T on the MXU
        preferred_element_type=jnp.float32, precision=_PREC)

    @pl.when(k == pl.num_programs(0) - 1)
    def _():
        g_ref[...] = g_ref[...] * inv_norm


def _gram_mse_kernel(gt_ref, x_ref, loss_ref, acc_ref, *, inv_norm, inv_cc):
    """Per-image Gram + MSE against the resident target Gram.

    grid = (B, K).  acc_ref is a per-core (C, C) f32 VMEM accumulator; every
    image b writes its own scalar partial, so the b axis is 'parallel'.
    """
    k = pl.program_id(1)

    @pl.when(k == 0)
    def _():
        acc_ref[...] = jnp.zeros_like(acc_ref)

    x = x_ref[0].astype(jnp.float32)                       # (C, tk)
    acc_ref[...] += jax.lax.dot_general(
        x, x, (((1,), (1,)), ((), ())),
        preferred_element_type=jnp.float32, precision=_PREC)

    @pl.when(k == pl.num_programs(1) - 1)
    def _():
        d = acc_ref[...] * inv_norm - gt_ref[...]
        loss_ref[0, 0] = jnp.sum(d * d) * inv_cc           # mean over C*C


def _layer_style_loss(target_f, out_f):
    t_bs, t_ch, t_w, t_h = target_f.shape
    assert t_bs == 1, "Network should be trained for only one target image"
    i_bs, i_ch, i_w, i_h = out_f.shape
    assert t_ch == i_ch, "Bug"

    C = t_ch
    hw_t = t_w * t_h
    hw_o = i_w * i_h
    xt = target_f.reshape(C, hw_t)
    xo = out_f.reshape(i_bs, C, hw_o)

    # ---- target Gram matrix (grid over the HW reduction axis) --------------
    tk_t = _pick_tk(hw_t, C, xt.dtype.itemsize)
    gram_t = pl.pallas_call(
        functools.partial(_gram_kernel, inv_norm=1.0 / (C * hw_t)),
        out_shape=jax.ShapeDtypeStruct((C, C), jnp.float32),
        grid=(hw_t // tk_t,),
        in_specs=[pl.BlockSpec((C, tk_t), lambda k: (0, k))],
        out_specs=pl.BlockSpec((C, C), lambda k: (0, 0)),
        compiler_params=pltpu.CompilerParams(
            dimension_semantics=("arbitrary",),            # reduction axis
            vmem_limit_bytes=_VMEM_LIMIT),
        cost_estimate=pl.CostEstimate(
            flops=2 * C * C * hw_t,
            transcendentals=0,
            bytes_accessed=xt.size * xt.dtype.itemsize + C * C * 4),
    )(xt)

    # ---- per-image Gram + MSE vs target (b parallel, HW reduction last) ----
    tk_o = _pick_tk(hw_o, C, xo.dtype.itemsize)
    partials = pl.pallas_call(
        functools.partial(_gram_mse_kernel,
                          inv_norm=1.0 / (C * hw_o),
                          inv_cc=1.0 / (C * C)),
        out_shape=jax.ShapeDtypeStruct((i_bs, 1), jnp.float32),
        grid=(i_bs, hw_o // tk_o),
        in_specs=[pl.BlockSpec((C, C), lambda b, k: (0, 0)),
                  pl.BlockSpec((1, C, tk_o), lambda b, k: (b, 0, k))],
        out_specs=pl.BlockSpec((1, 1), lambda b, k: (b, 0),
                               memory_space=pltpu.SMEM),
        scratch_shapes=[pltpu.VMEM((C, C), jnp.float32)],
        compiler_params=pltpu.CompilerParams(
            dimension_semantics=("parallel", "arbitrary"),
            vmem_limit_bytes=_VMEM_LIMIT),
        cost_estimate=pl.CostEstimate(
            flops=i_bs * (2 * C * C * hw_o + 3 * C * C),
            transcendentals=0,
            bytes_accessed=(xo.size * xo.dtype.itemsize
                            + C * C * 4 + i_bs * 4)),
    )(gram_t, xo)

    return jnp.sum(partials)                               # tiny: B scalars


def style_loss(target_features, output_features):
    """Matches PyTorch StyleLoss.forward (lists of per-layer feature maps)."""
    loss = jnp.float32(0.0)
    for target_f, out_f in zip(target_features, output_features):
        loss = loss + _layer_style_loss(target_f, out_f)
    return loss


if __name__ == "__main__":
    key = jax.random.PRNGKey(0)
    k1, k2, k3, k4 = jax.random.split(key, 4)
    # two feature "layers": target batch = 1, output batch = 2
    t1 = jax.random.normal(k1, (1, 32, 16, 16), dtype=jnp.float32)
    o1 = jax.random.normal(k2, (2, 32, 16, 16), dtype=jnp.float32)
    t2 = jax.random.normal(k3, (1, 64, 8, 8), dtype=jnp.float32)
    o2 = jax.random.normal(k4, (2, 64, 8, 8), dtype=jnp.float32)

    out = style_loss([t1, t2], [o1, o2])
    out = jax.block_until_ready(out)

    # plain-JAX reference with identical semantics to the PyTorch module
    def ref_loss(tfs, ofs):
        loss = 0.0
        for tf_, of_ in zip(tfs, ofs):
            _, tc, tw, th = tf_.shape
            tm = tf_.reshape(tc, tw * th)
            tg = jnp.matmul(tm, tm.T, precision=_PREC) / (tc * tw * th)
            ib, ic, iw, ih = of_.shape
            for b in range(ib):
                xm = of_[b].reshape(ic, iw * ih)
                ig = jnp.matmul(xm, xm.T, precision=_PREC) / (ic * iw * ih)
                loss = loss + jnp.mean((tg - ig) ** 2)
        return loss

    ref = ref_loss([t1, t2], [o1, o2])
    assert jnp.allclose(out, ref, rtol=1e-3, atol=1e-7), (out, ref)
    print("KERNEL_OK")
</pallas_src>

<mosaic_0001>
module attributes {stable_mosaic.version = 11 : i64} {
  func.func @_gram_kernel(%arg0: i32, %arg1: memref<32x256xf32, #tpu.memory_space<vmem>>, %arg2: memref<32x32xf32, #tpu.memory_space<vmem>>) attributes {dimension_semantics = [#tpu.dimension_semantics<arbitrary>], iteration_bounds = array<i64: 1>, scalar_prefetch = 0 : i64, scratch_operands = 0 : i64, tpu.core_type = #tpu.core_type<tc>, window_params = [{transform_indices = @transform_0, window_bounds = array<i64: 32, 256>}, {pipeline_mode = #tpu.pipeline_mode<synchronous>, transform_indices = @transform_1, window_bounds = array<i64: 32, 32>}]} {
    %c0_i32 = arith.constant 0 : i32
    %0 = arith.cmpi eq, %arg0, %c0_i32 : i32
    %1 = arith.extui %0 : i1 to i32
    %c0_i32_0 = arith.constant 0 : i32
    %2 = arith.cmpi ne, %1, %c0_i32_0 : i32
    scf.if %2 {
      %cst_8 = arith.constant 0.000000e+00 : f32
      %11 = vector.broadcast %cst_8 : f32 to vector<32x32xf32>
      %c0_9 = arith.constant 0 : index
      %c0_10 = arith.constant 0 : index
      %12 = vector.load %arg2[%c0_9, %c0_10] : memref<32x32xf32, #tpu.memory_space<vmem>>, vector<32x32xf32>
      tpu.vector_store %arg2[%c0_9, %c0_10], %11 {strides = array<i32>} : memref<32x32xf32, #tpu.memory_space<vmem>>, vector<32x32xf32>,
    } else {
    }
    %c0 = arith.constant 0 : index
    %c0_1 = arith.constant 0 : index
    %3 = vector.load %arg1[%c0, %c0_1] : memref<32x256xf32, #tpu.memory_space<vmem>>, vector<32x256xf32>
    %c0_2 = arith.constant 0 : index
    %c0_3 = arith.constant 0 : index
    %4 = vector.load %arg2[%c0_2, %c0_3] : memref<32x32xf32, #tpu.memory_space<vmem>>, vector<32x32xf32>
    %cst = arith.constant dense<0.000000e+00> : vector<32x32xf32>
    %5 = tpu.matmul %3, %3, %cst {dimension_numbers = #tpu.dot_dimension_numbers<[1], [1], [0], [0], [0, 0, 1, 0], [], []>, precision = #tpu.contract_precision<fp32>} : vector<32x256xf32>, vector<32x256xf32>, vector<32x32xf32> -> vector<32x32xf32>
    %6 = arith.addf %4, %5 : vector<32x32xf32>
    %c0_4 = arith.constant 0 : index
    %c0_5 = arith.constant 0 : index
    %7 = vector.load %arg2[%c0_4, %c0_5] : memref<32x32xf32, #tpu.memory_space<vmem>>, vector<32x32xf32>
    tpu.vector_store %arg2[%c0_4, %c0_5], %6 {strides = array<i32>} : memref<32x32xf32, #tpu.memory_space<vmem>>, vector<32x32xf32>,
    %c0_i32_6 = arith.constant 0 : i32
    %8 = arith.cmpi eq, %arg0, %c0_i32_6 : i32
    %9 = arith.extui %8 : i1 to i32
    %c0_i32_7 = arith.constant 0 : i32
    %10 = arith.cmpi ne, %9, %c0_i32_7 : i32
    scf.if %10 {
      %c0_8 = arith.constant 0 : index
      %c0_9 = arith.constant 0 : index
      %11 = vector.load %arg2[%c0_8, %c0_9] : memref<32x32xf32, #tpu.memory_space<vmem>>, vector<32x32xf32>
      %cst_10 = arith.constant 1.22070313E-4 : f32
      %12 = vector.broadcast %cst_10 : f32 to vector<32x32xf32>
      %13 = arith.mulf %11, %12 : vector<32x32xf32>
      %c0_11 = arith.constant 0 : index
      %c0_12 = arith.constant 0 : index
      %14 = vector.load %arg2[%c0_11, %c0_12] : memref<32x32xf32, #tpu.memory_space<vmem>>, vector<32x32xf32>
      tpu.vector_store %arg2[%c0_11, %c0_12], %13 {strides = array<i32>} : memref<32x32xf32, #tpu.memory_space<vmem>>, vector<32x32xf32>,
    } else {
    }
    return
  }
  func.func @transform_0(%arg0: i32) -> (i32, i32) {
    %c0_i32 = arith.constant 0 : i32
    %c0_i32_0 = arith.constant 0 : i32
    return %c0_i32, %arg0 : i32, i32
  }
  func.func @transform_1(%arg0: i32) -> (i32, i32) {
    %c0_i32 = arith.constant 0 : i32
    %c0_i32_0 = arith.constant 0 : i32
    %c0_i32_1 = arith.constant 0 : i32
    return %c0_i32, %c0_i32_0 : i32, i32
  }
}

</mosaic_0001>

<llo_original>
// kernel: tpu_custom_call.1
$region0: #{tpu_custom_call.1}
  #allocation0 [shape = 'u32[]', space=smem, size = 0x4, offset = 0x4, fixed_abs, tag = 'smem constant byte address 0x4 - core index']
  #allocation1 [shape = 'u32[144,128]{1,0:T(1,128)}', space=vmem, size = 0x12000, scoped, tag = 'internal scratch']
  %s0 = inlined_call_operand.hbm [shape: f32[32,256], index: 0, kind: input, shape index: {}]
  %s1 = inlined_call_operand.hbm [shape: f32[32,32], index: 1, kind: output, shape index: {}]
  %s2 = sld [smem:[#allocation0]]
  $region26: #{tpu_custom_call.1} parent=0
    _
  %s4 = ssub.s32 1, %s2
  %s5 = scalar_select 0, %s4, %s2
  $region1: #{tpu_custom_call.1} parent=0
    #allocation2 [shape = 'u8[32768]{0}', space=vmem, size = 0x8000, scoped, tag = 'input window, operand 0, single buffered']
    #allocation3 [shape = 's32[1]{0}', space=sflag, size = 0x4, scoped, tag = 'scoped memory for tpu_custom_call.1']
    #allocation4 [shape = 's32[1]{0}', space=sflag, size = 0x4, scoped, tag = 'scoped memory for tpu_custom_call.1']
    #allocation5 [shape = 'u8[16384]{0}', space=vmem, size = 0x4000, scoped, tag = 'output window, operand 0, single buffered']
    %6 = vsyncpa [#allocation3], 0
    %7 = vsyncpa [#allocation4], 0
    // Predicated region
    $region2: #{tpu_custom_call.1} parent=1 // pred_check
      _
    $region3: #{tpu_custom_call.1} parent=1 // pred_check_branch
      %9 = sbr.rel (0) target = $region5
    $region4: #{tpu_custom_call.1} parent=1 // pred_region
      %s11 = ssub.s32 1024, 1024
      %12 = vsyncadd [#allocation3], %s11
      %s13 = sshll.u32 [#allocation2], 4
      %s14 = int_to_ptr.vmem [resolvable:$true] %s13
      %19 = dma.hbm_to_vmem [thread:$0]  %s0, 1024, %s14, [#allocation3], 256, 256, 16
    $region5: #{tpu_custom_call.1} parent=1 // pred_fallthru
      _
    // Predicated region
    $region6: #{tpu_custom_call.1} parent=1 // pred_check
      _
    $region7: #{tpu_custom_call.1} parent=1 // pred_check_branch
      %21 = sbr.rel (0) target = $region9
    $region8: #{tpu_custom_call.1} parent=1 // pred_region
      %22 = dma.done [#allocation3], 1024
    $region9: #{tpu_custom_call.1} parent=1 // pred_fallthru
      _
    %p23 = scmp.eq.s32.totalorder 0, 0
    // Predicated region
    $region10: #{tpu_custom_call.1} parent=1 // pred_check
      %p24 = pneg %p23
    $region11: #{tpu_custom_call.1} parent=1 // pred_check_branch
      %26 = sbr.rel (%p24) target = $region13
    $region12: #{tpu_custom_call.1} parent=1 // pred_region
      %vm27 = vcmask 261120
      %28 = vst.msk [vmem:[#allocation5] sm:$0xff] %vm27, 0.0
      %29 = vst.msk [vmem:[#allocation5 + $0x8] sm:$0xff] %vm27, 0.0
      %30 = vst.msk [vmem:[#allocation5 + $0x10] sm:$0xff] %vm27, 0.0
      %31 = vst.msk [vmem:[#allocation5 + $0x18] sm:$0xff] %vm27, 0.0
    $region13: #{tpu_custom_call.1} parent=1 // pred_fallthru
      _
    %v32 = vld [vmem:[#allocation2] sm:$0xff]
    %v33 = vld [vmem:[#allocation2 + $0x8] sm:$0xff]
    %v34 = vld [vmem:[#allocation2 + $0x10] sm:$0xff]
    %v35 = vld [vmem:[#allocation2 + $0x18] sm:$0xff]
    %v36 = vld [vmem:[#allocation2 + $0x20] sm:$0xff]
    %v37 = vld [vmem:[#allocation2 + $0x28] sm:$0xff]
    %v38 = vld [vmem:[#allocation2 + $0x30] sm:$0xff]
    %v39 = vld [vmem:[#allocation2 + $0x38] sm:$0xff]
    %v40 = vld [vmem:[#allocation5] sm:$0xff]
    %v41 = vld [vmem:[#allocation5 + $0x8] sm:$0xff]
    %v42 = vld [vmem:[#allocation5 + $0x10] sm:$0xff]
    %v43 = vld [vmem:[#allocation5 + $0x18] sm:$0xff]
    %v44 = vand.u32 %v33, 4294901760
    %45 = vmatprep.subr.mxu0 %v44
    %v46 = vand.u32 %v32, 4294901760
    %47 = vmatpush1.xpose.msra.mxu0 %v46
    %v48 = vand.u32 %v35, 4294901760
    %49 = vmatprep.subr.mxu0 %v48
    %v50 = vand.u32 %v34, 4294901760
    %51 = vmatpush1.xpose.msra.mxu0 %v50
    %v52 = vand.u32 %v37, 4294901760
    %53 = vmatprep.subr.mxu0 %v52
    %v54 = vand.u32 %v36, 4294901760
    %55 = vmatpush1.xpose.msra.mxu0 %v54
    %v56 = vand.u32 %v39, 4294901760
    %57 = vmatprep.subr.mxu0 %v56
    %v58 = vand.u32 %v38, 4294901760
    %59 = vmatpush1.xpose.msra.mxu0 %v58
    %60 = vmatprep.subr.mxu0 0.0
    %61 = vmatpush1.xpose.msra.mxu0 0.0
    %62 = vmatprep.subr.mxu0 0.0
    %63 = vmatpush1.xpose.msra.mxu0 0.0
    %64 = vmatprep.subr.mxu0 0.0
    %65 = vmatpush1.xpose.msra.mxu0 0.0
    %66 = vmatprep.subr.mxu0 0.0
    %67 = vmatpush1.xpose.msra.mxu0 0.0
    %68 = vmatprep.subr.mxu0 0.0
    %69 = vmatpush1.xpose.msra.mxu0 0.0
    %70 = vmatprep.subr.mxu0 0.0
    %71 = vmatpush1.xpose.msra.mxu0 0.0
    %72 = vmatprep.subr.mxu0 0.0
    %73 = vmatpush1.xpose.msra.mxu0 0.0
    %74 = vmatprep.subr.mxu0 0.0
    %75 = vmatpush1.xpose.msra.mxu0 0.0
    %76 = vmatprep.subr.mxu0 0.0
    %77 = vmatpush1.xpose.msra.mxu0 0.0
    %78 = vmatprep.subr.mxu0 0.0
    %79 = vmatpush1.xpose.msra.mxu0 0.0
    %80 = vmatprep.subr.mxu0 0.0
    %81 = vmatpush1.xpose.msra.mxu0 0.0
    %82 = vmatprep.subr.mxu0 0.0
    %83 = vmatpush1.xpose.msra.mxu0 0.0
    %84 = vmatprep.subr.mxu0 0.0
    %85 = vmatpush1.xpose.msra.mxu0 0.0
    %86 = vmatprep.subr.mxu0 0.0
    %87 = vmatpush1.xpose.msra.mxu0 0.0
    %88 = vmatprep.subr.mxu0 0.0
    %89 = vmatpush1.xpose.msra.mxu0 0.0
    %90 = vmatprep.subr.mxu0 0.0
    %91 = vmatpush1.xpose.msra.mxu0 0.0
    %92 = vmatprep.subr.mxu0 0.0
    %93 = vmatpush1.xpose.msra.mxu0 0.0
    %94 = vmatprep.subr.mxu0 0.0
    %95 = vmatpush1.xpose.msra.mxu0 0.0
    %96 = vmatprep.subr.mxu0 0.0
    %97 = vmatpush1.xpose.msra.mxu0 0.0
    %98 = vmatprep.subr.mxu0 0.0
    %99 = vmatpush1.xpose.msra.mxu0 0.0
    %100 = vmatprep.subr.mxu0 0.0
    %101 = vmatpush1.xpose.msra.mxu0 0.0
    %102 = vmatprep.subr.mxu0 0.0
    %103 = vmatpush1.xpose.msra.mxu0 0.0
    %104 = vmatprep.subr.mxu0 0.0
    %105 = vmatpush1.xpose.msra.mxu0 0.0
    %106 = vmatprep.subr.mxu0 0.0
    %107 = vmatpush1.xpose.msra.mxu0 0.0
    %108 = vmatprep.subr.mxu0 0.0
    %109 = vmatpush1.xpose.msra.mxu0 0.0
    %110 = vmatprep.subr.mxu0 0.0
    %111 = vmatpush1.xpose.msra.mxu0 0.0
    %112 = vmatprep.subr.mxu0 0.0
    %113 = vmatpush1.xpose.msra.mxu0 0.0
    %114 = vmatprep.subr.mxu0 0.0
    %115 = vmatpush1.xpose.msra.mxu0 0.0
    %v116 = vand.u32 %v33, 4294901760
    %v117 = vsub.f32 %v33, %v116
    %v118 = vand.u32 %v117, 4294901760
    %v119 = vsub.f32 %v117, %v118
    %v120 = vand.u32 %v119, 4294901760
    %121 = vmatprep.mubr.f32.mxu0 %v120
    %v122 = vand.u32 %v32, 4294901760
    %v123 = vsub.f32 %v32, %v122
    %v124 = vand.u32 %v123, 4294901760
    %v125 = vsub.f32 %v123, %v124
    %v126 = vand.u32 %v125, 4294901760
    %127 = vmatmul.mubr.f32.gmra.mrb[0].mxu0 %v126
    %v128 = vpop.f32.mrb[0].mxu0
    %v129 = vadd.f32 0.0, %v128
    %v130 = vpop.f32.mrb[0].mxu0
    %v131 = vand.u32 %v35, 4294901760
    %v132 = vsub.f32 %v35, %v131
    %v133 = vand.u32 %v132, 4294901760
    %v134 = vsub.f32 %v132, %v133
    %v135 = vand.u32 %v134, 4294901760
    %136 = vmatprep.mubr.f32.mxu0 %v135
    %v137 = vand.u32 %v34, 4294901760
    %v138 = vsub.f32 %v34, %v137
    %v139 = vand.u32 %v138, 4294901760
    %v140 = vsub.f32 %v138, %v139
    %v141 = vand.u32 %v140, 4294901760
    %142 = vmatmul.mubr.f32.gmra.mrb[0].mxu0 %v141
    %v143 = vpop.f32.mrb[0].mxu0
    %v144 = vadd.f32 0.0, %v143
    %v145 = vpop.f32.mrb[0].mxu0
    %v146 = vand.u32 %v37, 4294901760
    %v147 = vsub.f32 %v37, %v146
    %v148 = vand.u32 %v147, 4294901760
    %v149 = vsub.f32 %v147, %v148
    %v150 = vand.u32 %v149, 4294901760
    %151 = vmatprep.mubr.f32.mxu0 %v150
    %v152 = vand.u32 %v36, 4294901760
    %v153 = vsub.f32 %v36, %v152
    %v154 = vand.u32 %v153, 4294901760
    %v155 = vsub.f32 %v153, %v154
    %v156 = vand.u32 %v155, 4294901760
    %157 = vmatmul.mubr.f32.gmra.mrb[0].mxu0 %v156
    %v158 = vpop.f32.mrb[0].mxu0
    %v159 = vadd.f32 0.0, %v158
    %v160 = vpop.f32.mrb[0].mxu0
    %v161 = vand.u32 %v39, 4294901760
    %v162 = vsub.f32 %v39, %v161
    %v163 = vand.u32 %v162, 4294901760
    %v164 = vsub.f32 %v162, %v163
    %v165 = vand.u32 %v164, 4294901760
    %166 = vmatprep.mubr.f32.mxu0 %v165
    %v167 = vand.u32 %v38, 4294901760
    %v168 = vsub.f32 %v38, %v167
    %v169 = vand.u32 %v168, 4294901760
    %v170 = vsub.f32 %v168, %v169
    %v171 = vand.u32 %v170, 4294901760
    %172 = vmatmul.mubr.f32.gmra.mrb[0].mxu0 %v171
    %v173 = vpop.f32.mrb[0].mxu0
    %v174 = vadd.f32 0.0, %v173
    %v175 = vpop.f32.mrb[0].mxu0
    %176 = vdwg.mxu0
    %v177 = vand.u32 %v33, 4294901760
    %v178 = vsub.f32 %v33, %v177
    %v179 = vand.u32 %v178, 4294901760
    %v180 = vsub.f32 %v178, %v179
    %v181 = vand.u32 %v180, 4294901760
    %182 = vmatprep.subr.mxu0 %v181
    %v183 = vand.u32 %v32, 4294901760
    %v184 = vsub.f32 %v32, %v183
    %v185 = vand.u32 %v184, 4294901760
    %v186 = vsub.f32 %v184, %v185
    %v187 = vand.u32 %v186, 4294901760
    %188 = vmatpush1.xpose.msra.mxu0 %v187
    %v189 = vand.u32 %v35, 4294901760
    %v190 = vsub.f32 %v35, %v189
    %v191 = vand.u32 %v190, 4294901760
    %v192 = vsub.f32 %v190, %v191
    %v193 = vand.u32 %v192, 4294901760
    %194 = vmatprep.subr.mxu0 %v193
    %v195 = vand.u32 %v34, 4294901760
    %v196 = vsub.f32 %v34, %v195
    %v197 = vand.u32 %v196, 4294901760
    %v198 = vsub.f32 %v196, %v197
    %v199 = vand.u32 %v198, 4294901760
    %200 = vmatpush1.xpose.msra.mxu0 %v199
    %v201 = vand.u32 %v37, 4294901760
    %v202 = vsub.f32 %v37, %v201
    %v203 = vand.u32 %v202, 4294901760
    %v204 = vsub.f32 %v202, %v203
    %v205 = vand.u32 %v204, 4294901760
    %206 = vmatprep.subr.mxu0 %v205
    %v207 = vand.u32 %v36, 4294901760
    %v208 = vsub.f32 %v36, %v207
    %v209 = vand.u32 %v208, 4294901760
    %v210 = vsub.f32 %v208, %v209
    %v211 = vand.u32 %v210, 4294901760
    %212 = vmatpush1.xpose.msra.mxu0 %v211
    %v213 = vand.u32 %v39, 4294901760
    %v214 = vsub.f32 %v39, %v213
    %v215 = vand.u32 %v214, 4294901760
    %v216 = vsub.f32 %v214, %v215
    %v217 = vand.u32 %v216, 4294901760
    %218 = vmatprep.subr.mxu0 %v217
    %v219 = vand.u32 %v38, 4294901760
    %v220 = vsub.f32 %v38, %v219
    %v221 = vand.u32 %v220, 4294901760
    %v222 = vsub.f32 %v220, %v221
    %v223 = vand.u32 %v222, 4294901760
    %224 = vmatpush1.xpose.msra.mxu0 %v223
    %225 = vmatprep.subr.mxu0 0.0
    %226 = vmatpush1.xpose.msra.mxu0 0.0
    %227 = vmatprep.subr.mxu0 0.0
    %228 = vmatpush1.xpose.msra.mxu0 0.0
    %229 = vmatprep.subr.mxu0 0.0
    %230 = vmatpush1.xpose.msra.mxu0 0.0
    %231 = vmatprep.subr.mxu0 0.0
    %232 = vmatpush1.xpose.msra.mxu0 0.0
    %233 = vmatprep.subr.mxu0 0.0
    %234 = vmatpush1.xpose.msra.mxu0 0.0
    %235 = vmatprep.subr.mxu0 0.0
    %236 = vmatpush1.xpose.msra.mxu0 0.0
    %237 = vmatprep.subr.mxu0 0.0
    %238 = vmatpush1.xpose.msra.mxu0 0.0
    %239 = vmatprep.subr.mxu0 0.0
    %240 = vmatpush1.xpose.msra.mxu0 0.0
    %241 = vmatprep.subr.mxu0 0.0
    %242 = vmatpush1.xpose.msra.mxu0 0.0
    %243 = vmatprep.subr.mxu0 0.0
    %244 = vmatpush1.xpose.msra.mxu0 0.0
    %245 = vmatprep.subr.mxu0 0.0
    %246 = vmatpush1.xpose.msra.mxu0 0.0
    %247 = vmatprep.subr.mxu0 0.0
    %248 = vmatpush1.xpose.msra.mxu0 0.0
    %249 = vmatprep.subr.mxu0 0.0
    %250 = vmatpush1.xpose.msra.mxu0 0.0
    %251 = vmatprep.subr.mxu0 0.0
    %252 = vmatpush1.xpose.msra.mxu0 0.0
    %253 = vmatprep.subr.mxu0 0.0
    %254 = vmatpush1.xpose.msra.mxu0 0.0
    %255 = vmatprep.subr.mxu0 0.0
    %256 = vmatpush1.xpose.msra.mxu0 0.0
    %257 = vmatprep.subr.mxu0 0.0
    %258 = vmatpush1.xpose.msra.mxu0 0.0
    %259 = vmatprep.subr.mxu0 0.0
    %260 = vmatpush1.xpose.msra.mxu0 0.0
    %261 = vmatprep.subr.mxu0 0.0
    %262 = vmatpush1.xpose.msra.mxu0 0.0
    %263 = vmatprep.subr.mxu0 0.0
    %264 = vmatpush1.xpose.msra.mxu0 0.0
    %265 = vmatprep.subr.mxu0 0.0
    %266 = vmatpush1.xpose.msra.mxu0 0.0
    %267 = vmatprep.subr.mxu0 0.0
    %268 = vmatpush1.xpose.msra.mxu0 0.0
    %269 = vmatprep.subr.mxu0 0.0
    %270 = vmatpush1.xpose.msra.mxu0 0.0
    %271 = vmatprep.subr.mxu0 0.0
    %272 = vmatpush1.xpose.msra.mxu0 0.0
    %273 = vmatprep.subr.mxu0 0.0
    %274 = vmatpush1.xpose.msra.mxu0 0.0
    %275 = vmatprep.subr.mxu0 0.0
    %276 = vmatpush1.xpose.msra.mxu0 0.0
    %277 = vmatprep.subr.mxu0 0.0
    %278 = vmatpush1.xpose.msra.mxu0 0.0
    %279 = vmatprep.subr.mxu0 0.0
    %280 = vmatpush1.xpose.msra.mxu0 0.0
    %v281 = vand.u32 %v33, 4294901760
    %282 = vmatprep.mubr.f32.mxu0 %v281
    %v283 = vand.u32 %v32, 4294901760
    %284 = vmatmul.mubr.f32.gmra.mrb[0].mxu0 %v283
    %v285 = vpop.f32.mrb[0].mxu0
    %v286 = vadd.f32 %v129, %v285
    %v287 = vpop.f32.mrb[0].mxu0
    %v288 = vand.u32 %v35, 4294901760
    %289 = vmatprep.mubr.f32.mxu0 %v288
    %v290 = vand.u32 %v34, 4294901760
    %291 = vmatmul.mubr.f32.gmra.mrb[0].mxu0 %v290
    %v292 = vpop.f32.mrb[0].mxu0
    %v293 = vadd.f32 %v144, %v292
    %v294 = vpop.f32.mrb[0].mxu0
    %v295 = vand.u32 %v37, 4294901760
    %296 = vmatprep.mubr.f32.mxu0 %v295
    %v297 = vand.u32 %v36, 4294901760
    %298 = vmatmul.mubr.f32.gmra.mrb[0].mxu0 %v297
    %v299 = vpop.f32.mrb[0].mxu0
    %v300 = vadd.f32 %v159, %v299
    %v301 = vpop.f32.mrb[0].mxu0
    %v302 = vand.u32 %v39, 4294901760
    %303 = vmatprep.mubr.f32.mxu0 %v302
    %v304 = vand.u32 %v38, 4294901760
    %305 = vmatmul.mubr.f32.gmra.mrb[0].mxu0 %v304
    %v306 = vpop.f32.mrb[0].mxu0
    %v307 = vadd.f32 %v174, %v306
    %v308 = vpop.f32.mrb[0].mxu0
    %309 = vdwg.mxu0
    %v310 = vand.u32 %v33, 4294901760
    %v311 = vsub.f32 %v33, %v310
    %312 = vmatprep.subr.mxu0 %v311
    %v313 = vand.u32 %v32, 4294901760
    %v314 = vsub.f32 %v32, %v313
    %315 = vmatpush1.xpose.msra.mxu0 %v314
    %v316 = vand.u32 %v35, 4294901760
    %v317 = vsub.f32 %v35, %v316
    %318 = vmatprep.subr.mxu0 %v317
    %v319 = vand.u32 %v34, 4294901760
    %v320 = vsub.f32 %v34, %v319
    %321 = vmatpush1.xpose.msra.mxu0 %v320
    %v322 = vand.u32 %v37, 4294901760
    %v323 = vsub.f32 %v37, %v322
    %324 = vmatprep.subr.mxu0 %v323
    %v325 = vand.u32 %v36, 4294901760
    %v326 = vsub.f32 %v36, %v325
    %327 = vmatpush1.xpose.msra.mxu0 %v326
    %v328 = vand.u32 %v39, 4294901760
    %v329 = vsub.f32 %v39, %v328
    %330 = vmatprep.subr.mxu0 %v329
    %v331 = vand.u32 %v38, 4294901760
    %v332 = vsub.f32 %v38, %v331
    %333 = vmatpush1.xpose.msra.mxu0 %v332
    %334 = vmatprep.subr.mxu0 0.0
    %335 = vmatpush1.xpose.msra.mxu0 0.0
    %336 = vmatprep.subr.mxu0 0.0
    %337 = vmatpush1.xpose.msra.mxu0 0.0
    %338 = vmatprep.subr.mxu0 0.0
    %339 = vmatpush1.xpose.msra.mxu0 0.0
    %340 = vmatprep.subr.mxu0 0.0
    %341 = vmatpush1.xpose.msra.mxu0 0.0
    %342 = vmatprep.subr.mxu0 0.0
    %343 = vmatpush1.xpose.msra.mxu0 0.0
    %344 = vmatprep.subr.mxu0 0.0
    %345 = vmatpush1.xpose.msra.mxu0 0.0
    %346 = vmatprep.subr.mxu0 0.0
    %347 = vmatpush1.xpose.msra.mxu0 0.0
    %348 = vmatprep.subr.mxu0 0.0
    %349 = vmatpush1.xpose.msra.mxu0 0.0
    %350 = vmatprep.subr.mxu0 0.0
    %351 = vmatpush1.xpose.msra.mxu0 0.0
    %352 = vmatprep.subr.mxu0 0.0
    %353 = vmatpush1.xpose.msra.mxu0 0.0
    %354 = vmatprep.subr.mxu0 0.0
    %355 = vmatpush1.xpose.msra.mxu0 0.0
    %356 = vmatprep.subr.mxu0 0.0
    %357 = vmatpush1.xpose.msra.mxu0 0.0
    %358 = vmatprep.subr.mxu0 0.0
    %359 = vmatpush1.xpose.msra.mxu0 0.0
    %360 = vmatprep.subr.mxu0 0.0
    %361 = vmatpush1.xpose.msra.mxu0 0.0
    %362 = vmatprep.subr.mxu0 0.0
    %363 = vmatpush1.xpose.msra.mxu0 0.0
    %364 = vmatprep.subr.mxu0 0.0
    %365 = vmatpush1.xpose.msra.mxu0 0.0
    %366 = vmatprep.subr.mxu0 0.0
    %367 = vmatpush1.xpose.msra.mxu0 0.0
    %368 = vmatprep.subr.mxu0 0.0
    %369 = vmatpush1.xpose.msra.mxu0 0.0
    %370 = vmatprep.subr.mxu0 0.0
    %371 = vmatpush1.xpose.msra.mxu0 0.0
    %372 = vmatprep.subr.mxu0 0.0
    %373 = vmatpush1.xpose.msra.mxu0 0.0
    %374 = vmatprep.subr.mxu0 0.0
    %375 = vmatpush1.xpose.msra.mxu0 0.0
    %376 = vmatprep.subr.mxu0 0.0
    %377 = vmatpush1.xpose.msra.mxu0 0.0
    %378 = vmatprep.subr.mxu0 0.0
    %379 = vmatpush1.xpose.msra.mxu0 0.0
    %380 = vmatprep.subr.mxu0 0.0
    %381 = vmatpush1.xpose.msra.mxu0 0.0
    %382 = vmatprep.subr.mxu0 0.0
    %383 = vmatpush1.xpose.msra.mxu0 0.0
    %384 = vmatprep.subr.mxu0 0.0
    %385 = vmatpush1.xpose.msra.mxu0 0.0
    %386 = vmatprep.subr.mxu0 0.0
    %387 = vmatpush1.xpose.msra.mxu0 0.0
    %388 = vmatprep.subr.mxu0 0.0
    %389 = vmatpush1.xpose.msra.mxu0 0.0
    %v390 = vand.u32 %v33, 4294901760
    %v391 = vsub.f32 %v33, %v390
    %392 = vmatprep.mubr.f32.mxu0 %v391
    %v393 = vand.u32 %v32, 4294901760
    %v394 = vsub.f32 %v32, %v393
    %395 = vmatmul.mubr.f32.gmra.mrb[0].mxu0 %v394
    %v396 = vpop.f32.mrb[0].mxu0
    %v397 = vadd.f32 %v286, %v396
    %v398 = vpop.f32.mrb[0].mxu0
    %v399 = vand.u32 %v35, 4294901760
    %v400 = vsub.f32 %v35, %v399
    %401 = vmatprep.mubr.f32.mxu0 %v400
    %v402 = vand.u32 %v34, 4294901760
    %v403 = vsub.f32 %v34, %v402
    %404 = vmatmul.mubr.f32.gmra.mrb[0].mxu0 %v403
    %v405 = vpop.f32.mrb[0].mxu0
    %v406 = vadd.f32 %v293, %v405
    %v407 = vpop.f32.mrb[0].mxu0
    %v408 = vand.u32 %v37, 4294901760
    %v409 = vsub.f32 %v37, %v408
    %410 = vmatprep.mubr.f32.mxu0 %v409
    %v411 = vand.u32 %v36, 4294901760
    %v412 = vsub.f32 %v36, %v411
    %413 = vmatmul.mubr.f32.gmra.mrb[0].mxu0 %v412
    %v414 = vpop.f32.mrb[0].mxu0
    %v415 = vadd.f32 %v300, %v414
    %v416 = vpop.f32.mrb[0].mxu0
    %v417 = vand.u32 %v39, 4294901760
    %v418 = vsub.f32 %v39, %v417
    %419 = vmatprep.mubr.f32.mxu0 %v418
    %v420 = vand.u32 %v38, 4294901760
    %v421 = vsub.f32 %v38, %v420
    %422 = vmatmul.mubr.f32.gmra.mrb[0].mxu0 %v421
    %v423 = vpop.f32.mrb[0].mxu0
    %v424 = vadd.f32 %v307, %v423
    %v425 = vpop.f32.mrb[0].mxu0
    %426 = vdwg.mxu0
    %v427 = vand.u32 %v33, 4294901760
    %428 = vmatprep.subr.mxu0 %v427
    %v429 = vand.u32 %v32, 4294901760
    %430 = vmatpush1.xpose.msra.mxu0 %v429
    %v431 = vand.u32 %v35, 4294901760
    %432 = vmatprep.subr.mxu0 %v431
    %v433 = vand.u32 %v34, 4294901760
    %434 = vmatpush1.xpose.msra.mxu0 %v433
    %v435 = vand.u32 %v37, 4294901760
    %436 = vmatprep.subr.mxu0 %v435
    %v437 = vand.u32 %v36, 4294901760
    %438 = vmatpush1.xpose.msra.mxu0 %v437
    %v439 = vand.u32 %v39, 4294901760
    %440 = vmatprep.subr.mxu0 %v439
    %v441 = vand.u32 %v38, 4294901760
    %442 = vmatpush1.xpose.msra.mxu0 %v441
    %443 = vmatprep.subr.mxu0 0.0
    %444 = vmatpush1.xpose.msra.mxu0 0.0
    %445 = vmatprep.subr.mxu0 0.0
    %446 = vmatpush1.xpose.msra.mxu0 0.0
    %447 = vmatprep.subr.mxu0 0.0
    %448 = vmatpush1.xpose.msra.mxu0 0.0
    %449 = vmatprep.subr.mxu0 0.0
    %450 = vmatpush1.xpose.msra.mxu0 0.0
    %451 = vmatprep.subr.mxu0 0.0
    %452 = vmatpush1.xpose.msra.mxu0 0.0
    %453 = vmatprep.subr.mxu0 0.0
    %454 = vmatpush1.xpose.msra.mxu0 0.0
    %455 = vmatprep.subr.mxu0 0.0
    %456 = vmatpush1.xpose.msra.mxu0 0.0
    %457 = vmatprep.subr.mxu0 0.0
    %458 = vmatpush1.xpose.msra.mxu0 0.0
    %459 = vmatprep.subr.mxu0 0.0
    %460 = vmatpush1.xpose.msra.mxu0 0.0
    %461 = vmatprep.subr.mxu0 0.0
    %462 = vmatpush1.xpose.msra.mxu0 0.0
    %463 = vmatprep.subr.mxu0 0.0
    %464 = vmatpush1.xpose.msra.mxu0 0.0
    %465 = vmatprep.subr.mxu0 0.0
    %466 = vmatpush1.xpose.msra.mxu0 0.0
    %467 = vmatprep.subr.mxu0 0.0
    %468 = vmatpush1.xpose.msra.mxu0 0.0
    %469 = vmatprep.subr.mxu0 0.0
    %470 = vmatpush1.xpose.msra.mxu0 0.0
    %471 = vmatprep.subr.mxu0 0.0
    %472 = vmatpush1.xpose.msra.mxu0 0.0
    %473 = vmatprep.subr.mxu0 0.0
    %474 = vmatpush1.xpose.msra.mxu0 0.0
    %475 = vmatprep.subr.mxu0 0.0
    %476 = vmatpush1.xpose.msra.mxu0 0.0
    %477 = vmatprep.subr.mxu0 0.0
    %478 = vmatpush1.xpose.msra.mxu0 0.0
    %479 = vmatprep.subr.mxu0 0.0
    %480 = vmatpush1.xpose.msra.mxu0 0.0
    %481 = vmatprep.subr.mxu0 0.0
    %482 = vmatpush1.xpose.msra.mxu0 0.0
    %483 = vmatprep.subr.mxu0 0.0
    %484 = vmatpush1.xpose.msra.mxu0 0.0
    %485 = vmatprep.subr.mxu0 0.0
    %486 = vmatpush1.xpose.msra.mxu0 0.0
    %487 = vmatprep.subr.mxu0 0.0
    %488 = vmatpush1.xpose.msra.mxu0 0.0
    %489 = vmatprep.subr.mxu0 0.0
    %490 = vmatpush1.xpose.msra.mxu0 0.0
    %491 = vmatprep.subr.mxu0 0.0
    %492 = vmatpush1.xpose.msra.mxu0 0.0
    %493 = vmatprep.subr.mxu0 0.0
    %494 = vmatpush1.xpose.msra.mxu0 0.0
    %495 = vmatprep.subr.mxu0 0.0
    %496 = vmatpush1.xpose.msra.mxu0 0.0
    %497 = vmatprep.subr.mxu0 0.0
    %498 = vmatpush1.xpose.msra.mxu0 0.0
    %v499 = vand.u32 %v33, 4294901760
    %v500 = vsub.f32 %v33, %v499
    %v501 = vand.u32 %v500, 4294901760
    %502 = vmatprep.mubr.f32.mxu0 %v501
    %v503 = vand.u32 %v32, 4294901760
    %v504 = vsub.f32 %v32, %v503
    %v505 = vand.u32 %v504, 4294901760
    %506 = vmatmul.mubr.f32.gmra.mrb[0].mxu0 %v505
    %v507 = vpop.f32.mrb[0].mxu0
    %v508 = vadd.f32 %v397, %v507
    %v509 = vpop.f32.mrb[0].mxu0
    %v510 = vand.u32 %v35, 4294901760
    %v511 = vsub.f32 %v35, %v510
    %v512 = vand.u32 %v511, 4294901760
    %513 = vmatprep.mubr.f32.mxu0 %v512
    %v514 = vand.u32 %v34, 4294901760
    %v515 = vsub.f32 %v34, %v514
    %v516 = vand.u32 %v515, 4294901760
    %517 = vmatmul.mubr.f32.gmra.mrb[0].mxu0 %v516
    %v518 = vpop.f32.mrb[0].mxu0
    %v519 = vadd.f32 %v406, %v518
    %v520 = vpop.f32.mrb[0].mxu0
    %v521 = vand.u32 %v37, 4294901760
    %v522 = vsub.f32 %v37, %v521
    %v523 = vand.u32 %v522, 4294901760
    %524 = vmatprep.mubr.f32.mxu0 %v523
    %v525 = vand.u32 %v36, 4294901760
    %v526 = vsub.f32 %v36, %v525
    %v527 = vand.u32 %v526, 4294901760
    %528 = vmatmul.mubr.f32.gmra.mrb[0].mxu0 %v527
    %v529 = vpop.f32.mrb[0].mxu0
    %v530 = vadd.f32 %v415, %v529
    %v531 = vpop.f32.mrb[0].mxu0
    %v532 = vand.u32 %v39, 4294901760
    %v533 = vsub.f32 %v39, %v532
    %v534 = vand.u32 %v533, 4294901760
    %535 = vmatprep.mubr.f32.mxu0 %v534
    %v536 = vand.u32 %v38, 4294901760
    %v537 = vsub.f32 %v38, %v536
    %v538 = vand.u32 %v537, 4294901760
    %539 = vmatmul.mubr.f32.gmra.mrb[0].mxu0 %v538
    %v540 = vpop.f32.mrb[0].mxu0
    %v541 = vadd.f32 %v424, %v540
    %v542 = vpop.f32.mrb[0].mxu0
    %543 = vdwg.mxu0
    %v544 = vand.u32 %v33, 4294901760
    %v545 = vsub.f32 %v33, %v544
    %v546 = vand.u32 %v545, 4294901760
    %547 = vmatprep.subr.mxu0 %v546
    %v548 = vand.u32 %v32, 4294901760
    %v549 = vsub.f32 %v32, %v548
    %v550 = vand.u32 %v549, 4294901760
    %551 = vmatpush1.xpose.msra.mxu0 %v550
    %v552 = vand.u32 %v35, 4294901760
    %v553 = vsub.f32 %v35, %v552
    %v554 = vand.u32 %v553, 4294901760
    %555 = vmatprep.subr.mxu0 %v554
    %v556 = vand.u32 %v34, 4294901760
    %v557 = vsub.f32 %v34, %v556
    %v558 = vand.u32 %v557, 4294901760
    %559 = vmatpush1.xpose.msra.mxu0 %v558
    %v560 = vand.u32 %v37, 4294901760
    %v561 = vsub.f32 %v37, %v560
    %v562 = vand.u32 %v561, 4294901760
    %563 = vmatprep.subr.mxu0 %v562
    %v564 = vand.u32 %v36, 4294901760
    %v565 = vsub.f32 %v36, %v564
    %v566 = vand.u32 %v565, 4294901760
    %567 = vmatpush1.xpose.msra.mxu0 %v566
    %v568 = vand.u32 %v39, 4294901760
    %v569 = vsub.f32 %v39, %v568
    %v570 = vand.u32 %v569, 4294901760
    %571 = vmatprep.subr.mxu0 %v570
    %v572 = vand.u32 %v38, 4294901760
    %v573 = vsub.f32 %v38, %v572
    %v574 = vand.u32 %v573, 4294901760
    %575 = vmatpush1.xpose.msra.mxu0 %v574
    %576 = vmatprep.subr.mxu0 0.0
    %577 = vmatpush1.xpose.msra.mxu0 0.0
    %578 = vmatprep.subr.mxu0 0.0
    %579 = vmatpush1.xpose.msra.mxu0 0.0
    %580 = vmatprep.subr.mxu0 0.0
    %581 = vmatpush1.xpose.msra.mxu0 0.0
    %582 = vmatprep.subr.mxu0 0.0
    %583 = vmatpush1.xpose.msra.mxu0 0.0
    %584 = vmatprep.subr.mxu0 0.0
    %585 = vmatpush1.xpose.msra.mxu0 0.0
    %586 = vmatprep.subr.mxu0 0.0
    %587 = vmatpush1.xpose.msra.mxu0 0.0
    %588 = vmatprep.subr.mxu0 0.0
    %589 = vmatpush1.xpose.msra.mxu0 0.0
    %590 = vmatprep.subr.mxu0 0.0
    %591 = vmatpush1.xpose.msra.mxu0 0.0
    %592 = vmatprep.subr.mxu0 0.0
    %593 = vmatpush1.xpose.msra.mxu0 0.0
    %594 = vmatprep.subr.mxu0 0.0
    %595 = vmatpush1.xpose.msra.mxu0 0.0
    %596 = vmatprep.subr.mxu0 0.0
    %597 = vmatpush1.xpose.msra.mxu0 0.0
    %598 = vmatprep.subr.mxu0 0.0
    %599 = vmatpush1.xpose.msra.mxu0 0.0
    %600 = vmatprep.subr.mxu0 0.0
    %601 = vmatpush1.xpose.msra.mxu0 0.0
    %602 = vmatprep.subr.mxu0 0.0
    %603 = vmatpush1.xpose.msra.mxu0 0.0
    %604 = vmatprep.subr.mxu0 0.0
    %605 = vmatpush1.xpose.msra.mxu0 0.0
    %606 = vmatprep.subr.mxu0 0.0
    %607 = vmatpush1.xpose.msra.mxu0 0.0
    %608 = vmatprep.subr.mxu0 0.0
    %609 = vmatpush1.xpose.msra.mxu0 0.0
    %610 = vmatprep.subr.mxu0 0.0
    %611 = vmatpush1.xpose.msra.mxu0 0.0
    %612 = vmatprep.subr.mxu0 0.0
    %613 = vmatpush1.xpose.msra.mxu0 0.0
    %614 = vmatprep.subr.mxu0 0.0
    %615 = vmatpush1.xpose.msra.mxu0 0.0
    %616 = vmatprep.subr.mxu0 0.0
    %617 = vmatpush1.xpose.msra.mxu0 0.0
    %618 = vmatprep.subr.mxu0 0.0
    %619 = vmatpush1.xpose.msra.mxu0 0.0
    %620 = vmatprep.subr.mxu0 0.0
    %621 = vmatpush1.xpose.msra.mxu0 0.0
    %622 = vmatprep.subr.mxu0 0.0
    %623 = vmatpush1.xpose.msra.mxu0 0.0
    %624 = vmatprep.subr.mxu0 0.0
    %625 = vmatpush1.xpose.msra.mxu0 0.0
    %626 = vmatprep.subr.mxu0 0.0
    %627 = vmatpush1.xpose.msra.mxu0 0.0
    %628 = vmatprep.subr.mxu0 0.0
    %629 = vmatpush1.xpose.msra.mxu0 0.0
    %630 = vmatprep.subr.mxu0 0.0
    %631 = vmatpush1.xpose.msra.mxu0 0.0
    %v632 = vand.u32 %v33, 4294901760
    %633 = vmatprep.mubr.f32.mxu0 %v632
    %v634 = vand.u32 %v32, 4294901760
    %635 = vmatmul.mubr.f32.gmra.mrb[0].mxu0 %v634
    %v636 = vpop.f32.mrb[0].mxu0
    %v637 = vadd.f32 %v508, %v636
    %v638 = vpop.f32.mrb[0].mxu0
    %v639 = vand.u32 %v35, 4294901760
    %640 = vmatprep.mubr.f32.mxu0 %v639
    %v641 = vand.u32 %v34, 4294901760
    %642 = vmatmul.mubr.f32.gmra.mrb[0].mxu0 %v641
    %v643 = vpop.f32.mrb[0].mxu0
    %v644 = vadd.f32 %v519, %v643
    %v645 = vpop.f32.mrb[0].mxu0
    %v646 = vand.u32 %v37, 4294901760
    %647 = vmatprep.mubr.f32.mxu0 %v646
    %v648 = vand.u32 %v36, 4294901760
    %649 = vmatmul.mubr.f32.gmra.mrb[0].mxu0 %v648
    %v650 = vpop.f32.mrb[0].mxu0
    %v651 = vadd.f32 %v530, %v650
    %v652 = vpop.f32.mrb[0].mxu0
    %v653 = vand.u32 %v39, 4294901760
    %654 = vmatprep.mubr.f32.mxu0 %v653
    %v655 = vand.u32 %v38, 4294901760
    %656 = vmatmul.mubr.f32.gmra.mrb[0].mxu0 %v655
    %v657 = vpop.f32.mrb[0].mxu0
    %v658 = vadd.f32 %v541, %v657
    %v659 = vpop.f32.mrb[0].mxu0
    %660 = vdwg.mxu0
    %v661 = vand.u32 %v33, 4294901760
    %662 = vmatprep.subr.mxu0 %v661
    %v663 = vand.u32 %v32, 4294901760
    %664 = vmatpush1.xpose.msra.mxu0 %v663
    %v665 = vand.u32 %v35, 4294901760
    %666 = vmatprep.subr.mxu0 %v665
    %v667 = vand.u32 %v34, 4294901760
    %668 = vmatpush1.xpose.msra.mxu0 %v667
    %v669 = vand.u32 %v37, 4294901760
    %670 = vmatprep.subr.mxu0 %v669
    %v671 = vand.u32 %v36, 4294901760
    %672 = vmatpush1.xpose.msra.mxu0 %v671
    %v673 = vand.u32 %v39, 4294901760
    %674 = vmatprep.subr.mxu0 %v673
    %v675 = vand.u32 %v38, 4294901760
    %676 = vmatpush1.xpose.msra.mxu0 %v675
    %677 = vmatprep.subr.mxu0 0.0
    %678 = vmatpush1.xpose.msra.mxu0 0.0
    %679 = vmatprep.subr.mxu0 0.0
    %680 = vmatpush1.xpose.msra.mxu0 0.0
    %681 = vmatprep.subr.mxu0 0.0
    %682 = vmatpush1.xpose.msra.mxu0 0.0
    %683 = vmatprep.subr.mxu0 0.0
    %684 = vmatpush1.xpose.msra.mxu0 0.0
    %685 = vmatprep.subr.mxu0 0.0
    %686 = vmatpush1.xpose.msra.mxu0 0.0
    %687 = vmatprep.subr.mxu0 0.0
    %688 = vmatpush1.xpose.msra.mxu0 0.0
    %689 = vmatprep.subr.mxu0 0.0
    %690 = vmatpush1.xpose.msra.mxu0 0.0
    %691 = vmatprep.subr.mxu0 0.0
    %692 = vmatpush1.xpose.msra.mxu0 0.0
    %693 = vmatprep.subr.mxu0 0.0
    %694 = vmatpush1.xpose.msra.mxu0 0.0
    %695 = vmatprep.subr.mxu0 0.0
    %696 = vmatpush1.xpose.msra.mxu0 0.0
    %697 = vmatprep.subr.mxu0 0.0
    %698 = vmatpush1.xpose.msra.mxu0 0.0
    %699 = vmatprep.subr.mxu0 0.0
    %700 = vmatpush1.xpose.msra.mxu0 0.0
    %701 = vmatprep.subr.mxu0 0.0
    %702 = vmatpush1.xpose.msra.mxu0 0.0
    %703 = vmatprep.subr.mxu0 0.0
    %704 = vmatpush1.xpose.msra.mxu0 0.0
    %705 = vmatprep.subr.mxu0 0.0
    %706 = vmatpush1.xpose.msra.mxu0 0.0
    %707 = vmatprep.subr.mxu0 0.0
    %708 = vmatpush1.xpose.msra.mxu0 0.0
    %709 = vmatprep.subr.mxu0 0.0
    %710 = vmatpush1.xpose.msra.mxu0 0.0
    %711 = vmatprep.subr.mxu0 0.0
    %712 = vmatpush1.xpose.msra.mxu0 0.0
    %713 = vmatprep.subr.mxu0 0.0
    %714 = vmatpush1.xpose.msra.mxu0 0.0
    %715 = vmatprep.subr.mxu0 0.0
    %716 = vmatpush1.xpose.msra.mxu0 0.0
    %717 = vmatprep.subr.mxu0 0.0
    %718 = vmatpush1.xpose.msra.mxu0 0.0
    %719 = vmatprep.subr.mxu0 0.0
    %720 = vmatpush1.xpose.msra.mxu0 0.0
    %721 = vmatprep.subr.mxu0 0.0
    %722 = vmatpush1.xpose.msra.mxu0 0.0
    %723 = vmatprep.subr.mxu0 0.0
    %724 = vmatpush1.xpose.msra.mxu0 0.0
    %725 = vmatprep.subr.mxu0 0.0
    %726 = vmatpush1.xpose.msra.mxu0 0.0
    %727 = vmatprep.subr.mxu0 0.0
    %728 = vmatpush1.xpose.msra.mxu0 0.0
    %729 = vmatprep.subr.mxu0 0.0
    %730 = vmatpush1.xpose.msra.mxu0 0.0
    %731 = vmatprep.subr.mxu0 0.0
    %732 = vmatpush1.xpose.msra.mxu0 0.0
    %v733 = vand.u32 %v33, 4294901760
    %734 = vmatprep.mubr.f32.mxu0 %v733
    %v735 = vand.u32 %v32, 4294901760
    %736 = vmatmul.mubr.f32.gmra.mrb[0].mxu0 %v735
    %v737 = vpop.f32.mrb[0].mxu0
    %v738 = vadd.f32 %v637, %v737
    %v739 = vpop.f32.mrb[0].mxu0
    %v740 = vand.u32 %v35, 4294901760
    %741 = vmatprep.mubr.f32.mxu0 %v740
    %v742 = vand.u32 %v34, 4294901760
    %743 = vmatmul.mubr.f32.gmra.mrb[0].mxu0 %v742
    %v744 = vpop.f32.mrb[0].mxu0
    %v745 = vadd.f32 %v644, %v744
    %v746 = vpop.f32.mrb[0].mxu0
    %v747 = vand.u32 %v37, 4294901760
    %748 = vmatprep.mubr.f32.mxu0 %v747
    %v749 = vand.u32 %v36, 4294901760
    %750 = vmatmul.mubr.f32.gmra.mrb[0].mxu0 %v749
    %v751 = vpop.f32.mrb[0].mxu0
    %v752 = vadd.f32 %v651, %v751
    %v753 = vpop.f32.mrb[0].mxu0
    %v754 = vand.u32 %v39, 4294901760
    %755 = vmatprep.mubr.f32.mxu0 %v754
    %v756 = vand.u32 %v38, 4294901760
    %757 = vmatmul.mubr.f32.gmra.mrb[0].mxu0 %v756
    %v758 = vpop.f32.mrb[0].mxu0
    %v759 = vadd.f32 %v658, %v758
    %v760 = vpop.f32.mrb[0].mxu0
    %761 = vdwg.mxu0
    %v762 = vadd.f32 %v40, %v738
    %v763 = vadd.f32 %v41, %v745
    %v764 = vadd.f32 %v42, %v752
    %v765 = vadd.f32 %v43, %v759
    %vm766 = vcmask 261120
    %767 = vst.msk [vmem:[#allocation5] sm:$0xff] %vm766, %v762
    %768 = vst.msk [vmem:[#allocation5 + $0x8] sm:$0xff] %vm766, %v763
    %769 = vst.msk [vmem:[#allocation5 + $0x10] sm:$0xff] %vm766, %v764
    %770 = vst.msk [vmem:[#allocation5 + $0x18] sm:$0xff] %vm766, %v765
    // Predicated region
    $region14: #{tpu_custom_call.1} parent=1 // pred_check
      %p771 = pneg %p23
    $region15: #{tpu_custom_call.1} parent=1 // pred_check_branch
      %773 = sbr.rel (%p771) target = $region17
    $region16: #{tpu_custom_call.1} parent=1 // pred_region
      %v774 = vld [vmem:[#allocation5] sm:$0xff]
      %v775 = vld [vmem:[#allocation5 + $0x8] sm:$0xff]
      %v776 = vld [vmem:[#allocation5 + $0x10] sm:$0xff]
      %v777 = vld [vmem:[#allocation5 + $0x18] sm:$0xff]
      %v778 = vmul.f32 %v774, 0.00012207031
      %v779 = vmul.f32 %v775, 0.00012207031
      %v780 = vmul.f32 %v776, 0.00012207031
      %v781 = vmul.f32 %v777, 0.00012207031
      %782 = vst.msk [vmem:[#allocation5] sm:$0xff] %vm766, %v778
      %783 = vst.msk [vmem:[#allocation5 + $0x8] sm:$0xff] %vm766, %v779
      %784 = vst.msk [vmem:[#allocation5 + $0x10] sm:$0xff] %vm766, %v780
      %785 = vst.msk [vmem:[#allocation5 + $0x18] sm:$0xff] %vm766, %v781
    $region17: #{tpu_custom_call.1} parent=1 // pred_fallthru
      _
    // Predicated region
    $region18: #{tpu_custom_call.1} parent=1 // pred_check
      _
    $region19: #{tpu_custom_call.1} parent=1 // pred_check_branch
      %787 = sbr.rel (0) target = $region21
    $region20: #{tpu_custom_call.1} parent=1 // pred_region
      %s789 = ssub.s32 512, 512
      %790 = vsyncadd [#allocation4], %s789
      %s791 = sshll.u32 [#allocation5], 4
      %s792 = int_to_ptr.vmem [resolvable:$true] %s791
      %797 = dma.vmem_to_hbm [thread:$0]  %s792, 512, %s1, [#allocation4], 128, 128, 8
    $region21: #{tpu_custom_call.1} parent=1 // pred_fallthru
      _
    // Predicated region
    $region22: #{tpu_custom_call.1} parent=1 // pred_check
      _
    $region23: #{tpu_custom_call.1} parent=1 // pred_check_branch
      %799 = sbr.rel (0) target = $region25
    $region24: #{tpu_custom_call.1} parent=1 // pred_region
      %800 = dma.done [#allocation4], 512
    $region25: #{tpu_custom_call.1} parent=1 // pred_fallthru
      _
    %801 = vsyncpa [#allocation3], 1
    %802 = vsyncpa [#allocation4], 1

</llo_original>
